<compile_context>
chip_gen: v5e
topology: v5e:2x2
jax: 0.10.0
libtpu: 0.0.40
codegen_flags: <defaults>
</compile_context>

<pallas_src>
import numpy as np
import jax
import jax.numpy as jnp
from jax.experimental import pallas as pl
from jax.experimental.pallas import tpu as pltpu

# ---- NhitsBlock configuration (mirrors __init__ args) ----
INPUT_LEN = 16
OUTPUT_LEN = 8
HIDDEN_DIMS = [32, 32]        # leadingMLP_hidden_dims
POOL_K = 4                    # pool_kernel_dim
DOWNSAMPLE = 2                # downsample_factor
EPS = 1e-5                    # BatchNorm1d eps
# activation='ReLU', pool='MaxPool1d', norm='BatchNorm1d', dropout_rate=0.1 (eval)

PAD = POOL_K // 2
L_POOL = (INPUT_LEN + 2 * PAD - POOL_K) // POOL_K + 1      # MaxPool1d output length
D0 = int(np.ceil(INPUT_LEN / POOL_K + 1))                  # leadingMLP_dims[0]
assert D0 == L_POOL, "chosen (input_len, pool_k) must make pool length == MLP input dim"
NB = int(max(INPUT_LEN // DOWNSAMPLE, 1))                  # backcast theta dim
NF = int(max(OUTPUT_LEN // DOWNSAMPLE, 1))                 # forecast theta dim
OUT_W = INPUT_LEN + OUTPUT_LEN                             # fused head output width (24)


# ----------------------------- kernel ---------------------------------------
def nhits_kernel(*refs):
    """refs = (xT, W1t,b1t, ..., Wnt,bnt, Wheadt,bheadt, out).

    xT     : (D0, TB) pooled input, feature-major (batch in lanes)
    Wit,bit: folded & transposed MLP weights, (fo, fi) and (fo, 1)
    Wheadt : (OUT_W, H) fused backcast|forecast head (last BN + interp folded in)
    out    : (OUT_W, TB); rows [:INPUT_LEN]=backcast, [INPUT_LEN:]=forecast
    """
    x_ref = refs[0]
    out_ref = refs[-1]
    wrefs = refs[1:-1]

    # Cast to f32 right after the load (safe on v5e, f32 accumulation everywhere).
    h = x_ref[...].astype(jnp.float32)                     # (D0, TB)

    # leading_MLP with eval BatchNorm folded into weights: W^T @ h + b, ReLU.
    n_layers = len(HIDDEN_DIMS)
    for i in range(n_layers):
        wT = wrefs[2 * i][...]                             # (fo, fi)
        b = wrefs[2 * i + 1][...]                          # (fo, 1)
        h = jnp.maximum(jnp.dot(wT, h, preferred_element_type=jnp.float32) + b, 0.0)

    # single fused head (backcast|forecast) with interpolation pre-multiplied.
    whT = wrefs[2 * n_layers][...]                         # (OUT_W, H)
    bh = wrefs[2 * n_layers + 1][...]                      # (OUT_W, 1)
    out_ref[...] = (jnp.dot(whT, h, preferred_element_type=jnp.float32) + bh
                    ).astype(out_ref.dtype)


# --------------------------- host-side helpers --------------------------------
def linear_interp_matrix(n_in, n_out):
    """M s.t. theta @ M == F.interpolate(theta[:,None,:], n_out, 'linear', align_corners=False)."""
    scale = n_in / n_out
    M = np.zeros((n_in, n_out), dtype=np.float32)
    for i in range(n_out):
        src = max((i + 0.5) * scale - 0.5, 0.0)
        lo = min(int(np.floor(src)), n_in - 1)
        lam = src - lo
        hi = min(lo + 1, n_in - 1)
        M[lo, i] += 1.0 - lam
        M[hi, i] += lam
    return M


def fold_params(raw_params):
    """Fold eval-mode BN into the following Linear, interp matrices into the heads,
    and TRANSPOSE everything for the feature-major kernel layout.

    Input : per layer (W, b, gamma, beta, mean, var), then (wb, bb, wf, bf)
            with W in PyTorch-equivalent (fi, fo) layout, b as (1, fo).
    Output: [W1t, b1t, ..., Wnt, bnt, Wheadt, bheadt] with
            Wit    = (diag(s_{i-1}) @ Wi)^T                        (fo, fi)
            bit    = (t_{i-1} @ Wi + bi)^T                          (fo, 1)
            Wheadt = concat(diag(s_n) Wb Mb, diag(s_n) Wf Mf)^T     (OUT_W, H)
            bheadt = concat((t_n Wb + bb) Mb, (t_n Wf + bf) Mf)^T   (OUT_W, 1)
    """
    n_layers = len(HIDDEN_DIMS)
    idx = 0
    folded = []
    carry_s = None   # BN scale  from previous layer, shape (1, fo_prev)
    carry_t = None   # BN offset from previous layer, shape (1, fo_prev)
    for _ in range(n_layers):
        w, b, g, be, m, v = raw_params[idx:idx + 6]
        idx += 6
        if carry_s is not None:
            b = carry_t @ w + b                 # use ORIGINAL w
            w = w * carry_s.reshape(-1, 1)      # diag(s_prev) @ W
        folded += [w.T, b.T]                    # (fo, fi), (fo, 1)
        s = g / jnp.sqrt(v + EPS)
        t = be - m * s
        carry_s, carry_t = s, t

    wb, bb, wf, bf = raw_params[idx:idx + 4]
    Mb = jnp.asarray(linear_interp_matrix(NB, INPUT_LEN))
    Mf = jnp.asarray(linear_interp_matrix(NF, OUTPUT_LEN))
    wb2 = (wb * carry_s.reshape(-1, 1)) @ Mb
    bb2 = (carry_t @ wb + bb) @ Mb
    wf2 = (wf * carry_s.reshape(-1, 1)) @ Mf
    bf2 = (carry_t @ wf + bf) @ Mf
    folded.append(jnp.concatenate([wb2, wf2], axis=1).T)   # (OUT_W, H)
    folded.append(jnp.concatenate([bb2, bf2], axis=1).T)   # (OUT_W, 1)
    return folded


def _maxpool_wrapper(x):
    """MaxPool1d(k=POOL_K, stride=POOL_K, pad=POOL_K//2) in XLA: (B, INPUT_LEN) -> (B, D0)."""
    B = x.shape[0]
    right = L_POOL * POOL_K - PAD - INPUT_LEN
    xpad = jnp.pad(x, ((0, 0), (PAD, right)), constant_values=-jnp.inf)
    return jnp.max(xpad.reshape(B, L_POOL, POOL_K), axis=-1)


def _round_up(a, m):
    return ((a + m - 1) // m) * m


def _choose_tile(B, tb_max):
    """Batch tile: multiple of 128 lanes, <= tb_max, and >=2 grid steps when possible."""
    bp128 = _round_up(max(B, 1), 128)
    tb = min(_round_up(tb_max, 128), bp128)
    if bp128 >= 2 * 128:                      # enough rows for two tiles
        tb = min(tb, _round_up((bp128 + 1) // 2, 128))   # v7x: use both TensorCores
    return max(tb, 128)


def nhits_block_forward(x, raw_params, tb=8192, io_dtype=jnp.float32):
    """Eval-mode NhitsBlock forward. Returns (backcast (B,INPUT_LEN), forecast (B,OUTPUT_LEN)).

    tb       : max batch-tile width (primary tuning knob; lanes, multiple of 128).
    io_dtype : dtype of the batch-streamed input slab (f32 or bf16); weights/acc stay f32.
    """
    B = x.shape[0]
    folded = fold_params(raw_params)

    # Pool in the wrapper, then go feature-major (batch in lanes).
    h0 = _maxpool_wrapper(x.astype(jnp.float32))           # (B, D0)
    xT = h0.T.astype(io_dtype)                             # (D0, B)

    TB = _choose_tile(B, tb)
    Bp = _round_up(B, TB)
    if Bp != B:
        xT = jnp.pad(xT, ((0, 0), (0, Bp - B)))            # zero cols (harmless, sliced off)

    in_specs = [pl.BlockSpec((D0, TB), lambda i: (0, i))]
    for p in folded:
        in_specs.append(pl.BlockSpec(p.shape, lambda i: (0, 0)))   # resident in VMEM

    out = pl.pallas_call(
        nhits_kernel,
        out_shape=jax.ShapeDtypeStruct((OUT_W, Bp), jnp.float32),
        grid=(Bp // TB,),
        in_specs=in_specs,
        out_specs=pl.BlockSpec((OUT_W, TB), lambda i: (0, i)),
        compiler_params=pltpu.CompilerParams(
            dimension_semantics=("parallel",),
            vmem_limit_bytes=48 * 1024 * 1024,   # > v5e's 16 MiB default, < v7x's 64 MiB physical
        ),
    )(xT, *folded)

    backcast = out[:INPUT_LEN, :B].T
    forecast = out[INPUT_LEN:, :B].T
    return backcast, forecast


# ----------------------------- parameters & reference -------------------------
def init_params(key):
    """Deterministic synthetic raw parameters (PyTorch-style (in,out) weight layout)."""
    params = []
    dims = [D0] + list(HIDDEN_DIMS)
    n_keys = 4 * len(HIDDEN_DIMS) + 2 * 2
    keys = jax.random.split(key, n_keys)
    ki = 0
    for i in range(1, len(dims)):
        fi, fo = dims[i - 1], dims[i]
        bound = 1.0 / np.sqrt(fi)
        w = jax.random.uniform(keys[ki], (fi, fo), jnp.float32, -bound, bound); ki += 1
        b = jax.random.uniform(keys[ki], (1, fo), jnp.float32, -bound, bound); ki += 1
        g = jax.random.uniform(keys[ki], (1, fo), jnp.float32, 0.5, 1.5); ki += 1      # BN gamma
        be = jax.random.uniform(keys[ki], (1, fo), jnp.float32, -0.1, 0.1); ki += 1    # BN beta
        m = jnp.zeros((1, fo), jnp.float32)                                            # running mean
        v = jnp.ones((1, fo), jnp.float32)                                             # running var
        params += [w, b, g, be, m, v]
    h_last = dims[-1]
    for out_dim in (NB, NF):
        bound = 1.0 / np.sqrt(h_last)
        w = jax.random.uniform(keys[ki], (h_last, out_dim), jnp.float32, -bound, bound); ki += 1
        b = jax.random.uniform(keys[ki], (1, out_dim), jnp.float32, -bound, bound); ki += 1
        params += [w, b]
    return params


def reference(x, params):
    """Pure-JAX reference of the same eval-mode forward (unfused, raw params)."""
    B = x.shape[0]
    right = L_POOL * POOL_K - PAD - INPUT_LEN
    xpad = jnp.pad(x, ((0, 0), (PAD, right)), constant_values=-jnp.inf)
    h = jnp.max(xpad.reshape(B, L_POOL, POOL_K), axis=-1)
    idx = 0
    for _ in HIDDEN_DIMS:
        w, b, g, be, m, v = params[idx:idx + 6]; idx += 6
        h = jnp.maximum(h @ w + b, 0.0)
        h = (h - m) * g / jnp.sqrt(v + EPS) + be
    wb, bb, wf, bf = params[idx:idx + 4]
    Mb = jnp.asarray(linear_interp_matrix(NB, INPUT_LEN))
    Mf = jnp.asarray(linear_interp_matrix(NF, OUTPUT_LEN))
    return (h @ wb + bb) @ Mb, (h @ wf + bf) @ Mf


if __name__ == "__main__":
    key = jax.random.PRNGKey(0)
    kx, kp = jax.random.split(key)
    B = 2
    x = jax.random.normal(kx, (B, INPUT_LEN), jnp.float32)
    params = init_params(kp)
    rb, rf = reference(x, params)

    # f32 I/O path (default): strict tolerance.
    back, fore = jax.block_until_ready(nhits_block_forward(x, params))
    assert back.shape == (B, INPUT_LEN) and fore.shape == (B, OUTPUT_LEN)
    np.testing.assert_allclose(np.asarray(back), np.asarray(rb), rtol=1e-4, atol=1e-4)
    np.testing.assert_allclose(np.asarray(fore), np.asarray(rf), rtol=1e-4, atol=1e-4)

    # bf16 input-slab path (halves batch-streamed HBM bytes): loose tolerance.
    back16, fore16 = jax.block_until_ready(
        nhits_block_forward(x, params, io_dtype=jnp.bfloat16))
    np.testing.assert_allclose(np.asarray(back16), np.asarray(rb), rtol=2e-2, atol=1e-1)
    np.testing.assert_allclose(np.asarray(fore16), np.asarray(rf), rtol=2e-2, atol=1e-1)

    print("KERNEL_OK")
</pallas_src>

<mosaic_0001>
module attributes {stable_mosaic.version = 11 : i64} {
  func.func @nhits_kernel(%arg0: i32, %arg1: memref<5x128xf32, #tpu.memory_space<vmem>>, %arg2: memref<32x5xf32, #tpu.memory_space<vmem>>, %arg3: memref<32x1xf32, #tpu.memory_space<vmem>>, %arg4: memref<32x32xf32, #tpu.memory_space<vmem>>, %arg5: memref<32x1xf32, #tpu.memory_space<vmem>>, %arg6: memref<24x32xf32, #tpu.memory_space<vmem>>, %arg7: memref<24x1xf32, #tpu.memory_space<vmem>>, %arg8: memref<24x128xf32, #tpu.memory_space<vmem>>) attributes {dimension_semantics = [#tpu.dimension_semantics<parallel>], iteration_bounds = array<i64: 1>, scalar_prefetch = 0 : i64, scratch_operands = 0 : i64, tpu.core_type = #tpu.core_type<tc>, window_params = [{transform_indices = @transform_0, window_bounds = array<i64: 5, 128>}, {pipeline_mode = #tpu.pipeline_mode<synchronous>, transform_indices = @transform_1, window_bounds = array<i64: 32, 5>}, {pipeline_mode = #tpu.pipeline_mode<synchronous>, transform_indices = @transform_2, window_bounds = array<i64: 32, 1>}, {pipeline_mode = #tpu.pipeline_mode<synchronous>, transform_indices = @transform_3, window_bounds = array<i64: 32, 32>}, {pipeline_mode = #tpu.pipeline_mode<synchronous>, transform_indices = @transform_4, window_bounds = array<i64: 32, 1>}, {pipeline_mode = #tpu.pipeline_mode<synchronous>, transform_indices = @transform_5, window_bounds = array<i64: 24, 32>}, {pipeline_mode = #tpu.pipeline_mode<synchronous>, transform_indices = @transform_6, window_bounds = array<i64: 24, 1>}, {transform_indices = @transform_7, window_bounds = array<i64: 24, 128>}]} {
    %c0 = arith.constant 0 : index
    %c0_0 = arith.constant 0 : index
    %0 = vector.load %arg1[%c0, %c0_0] : memref<5x128xf32, #tpu.memory_space<vmem>>, vector<5x128xf32>
    %c0_1 = arith.constant 0 : index
    %c0_2 = arith.constant 0 : index
    %1 = vector.load %arg2[%c0_1, %c0_2] : memref<32x5xf32, #tpu.memory_space<vmem>>, vector<32x5xf32>
    %c0_3 = arith.constant 0 : index
    %c0_4 = arith.constant 0 : index
    %2 = vector.load %arg3[%c0_3, %c0_4] : memref<32x1xf32, #tpu.memory_space<vmem>>, vector<32x1xf32>
    %cst = arith.constant dense<0.000000e+00> : vector<32x128xf32>
    %3 = tpu.matmul %1, %0, %cst {dimension_numbers = #tpu.dot_dimension_numbers<[1], [0], [0], [1], [0, 0, 1, 1], [], []>} : vector<32x5xf32>, vector<5x128xf32>, vector<32x128xf32> -> vector<32x128xf32>
    %4 = vector.broadcast %2 : vector<32x1xf32> to vector<32x128xf32>
    %5 = arith.addf %3, %4 : vector<32x128xf32>
    %cst_5 = arith.constant 0.000000e+00 : f32
    %6 = vector.broadcast %cst_5 : f32 to vector<32x128xf32>
    %7 = arith.maximumf %5, %6 : vector<32x128xf32>
    %c0_6 = arith.constant 0 : index
    %c0_7 = arith.constant 0 : index
    %8 = vector.load %arg4[%c0_6, %c0_7] : memref<32x32xf32, #tpu.memory_space<vmem>>, vector<32x32xf32>
    %c0_8 = arith.constant 0 : index
    %c0_9 = arith.constant 0 : index
    %9 = vector.load %arg5[%c0_8, %c0_9] : memref<32x1xf32, #tpu.memory_space<vmem>>, vector<32x1xf32>
    %cst_10 = arith.constant dense<0.000000e+00> : vector<32x128xf32>
    %10 = tpu.matmul %8, %7, %cst_10 {dimension_numbers = #tpu.dot_dimension_numbers<[1], [0], [0], [1], [0, 0, 1, 1], [], []>} : vector<32x32xf32>, vector<32x128xf32>, vector<32x128xf32> -> vector<32x128xf32>
    %11 = vector.broadcast %9 : vector<32x1xf32> to vector<32x128xf32>
    %12 = arith.addf %10, %11 : vector<32x128xf32>
    %cst_11 = arith.constant 0.000000e+00 : f32
    %13 = vector.broadcast %cst_11 : f32 to vector<32x128xf32>
    %14 = arith.maximumf %12, %13 : vector<32x128xf32>
    %c0_12 = arith.constant 0 : index
    %c0_13 = arith.constant 0 : index
    %15 = vector.load %arg6[%c0_12, %c0_13] : memref<24x32xf32, #tpu.memory_space<vmem>>, vector<24x32xf32>
    %c0_14 = arith.constant 0 : index
    %c0_15 = arith.constant 0 : index
    %16 = vector.load %arg7[%c0_14, %c0_15] : memref<24x1xf32, #tpu.memory_space<vmem>>, vector<24x1xf32>
    %cst_16 = arith.constant dense<0.000000e+00> : vector<24x128xf32>
    %17 = tpu.matmul %15, %14, %cst_16 {dimension_numbers = #tpu.dot_dimension_numbers<[1], [0], [0], [1], [0, 0, 1, 1], [], []>} : vector<24x32xf32>, vector<32x128xf32>, vector<24x128xf32> -> vector<24x128xf32>
    %18 = vector.broadcast %16 : vector<24x1xf32> to vector<24x128xf32>
    %19 = arith.addf %17, %18 : vector<24x128xf32>
    %c0_17 = arith.constant 0 : index
    %c0_18 = arith.constant 0 : index
    %20 = vector.load %arg8[%c0_17, %c0_18] : memref<24x128xf32, #tpu.memory_space<vmem>>, vector<24x128xf32>
    tpu.vector_store %arg8[%c0_17, %c0_18], %19 {strides = array<i32>} : memref<24x128xf32, #tpu.memory_space<vmem>>, vector<24x128xf32>,
    return
  }
  func.func @transform_0(%arg0: i32) -> (i32, i32) {
    %c0_i32 = arith.constant 0 : i32
    %c0_i32_0 = arith.constant 0 : i32
    return %c0_i32, %arg0 : i32, i32
  }
  func.func @transform_1(%arg0: i32) -> (i32, i32) {
    %c0_i32 = arith.constant 0 : i32
    %c0_i32_0 = arith.constant 0 : i32
    %c0_i32_1 = arith.constant 0 : i32
    return %c0_i32, %c0_i32_0 : i32, i32
  }
  func.func @transform_2(%arg0: i32) -> (i32, i32) {
    %c0_i32 = arith.constant 0 : i32
    %c0_i32_0 = arith.constant 0 : i32
    %c0_i32_1 = arith.constant 0 : i32
    return %c0_i32, %c0_i32_0 : i32, i32
  }
  func.func @transform_3(%arg0: i32) -> (i32, i32) {
    %c0_i32 = arith.constant 0 : i32
    %c0_i32_0 = arith.constant 0 : i32
    %c0_i32_1 = arith.constant 0 : i32
    return %c0_i32, %c0_i32_0 : i32, i32
  }
  func.func @transform_4(%arg0: i32) -> (i32, i32) {
    %c0_i32 = arith.constant 0 : i32
    %c0_i32_0 = arith.constant 0 : i32
    %c0_i32_1 = arith.constant 0 : i32
    return %c0_i32, %c0_i32_0 : i32, i32
  }
  func.func @transform_5(%arg0: i32) -> (i32, i32) {
    %c0_i32 = arith.constant 0 : i32
    %c0_i32_0 = arith.constant 0 : i32
    %c0_i32_1 = arith.constant 0 : i32
    return %c0_i32, %c0_i32_0 : i32, i32
  }
  func.func @transform_6(%arg0: i32) -> (i32, i32) {
    %c0_i32 = arith.constant 0 : i32
    %c0_i32_0 = arith.constant 0 : i32
    %c0_i32_1 = arith.constant 0 : i32
    return %c0_i32, %c0_i32_0 : i32, i32
  }
  func.func @transform_7(%arg0: i32) -> (i32, i32) {
    %c0_i32 = arith.constant 0 : i32
    %c0_i32_0 = arith.constant 0 : i32
    return %c0_i32, %arg0 : i32, i32
  }
}

</mosaic_0001>

<llo_original>
// kernel: tpu_custom_call.1
$region0: #{tpu_custom_call.1}
  #allocation0 [shape = 'u32[]', space=smem, size = 0x4, offset = 0x4, fixed_abs, tag = 'smem constant byte address 0x4 - core index']
  #allocation1 [shape = 'u32[72,128]{1,0:T(1,128)}', space=vmem, size = 0x9000, scoped, tag = 'internal scratch']
  %s0 = inlined_call_operand.vmem [shape: f32[5,128], index: 0, kind: input, shape index: {}]
  %s1 = inlined_call_operand.vmem [shape: f32[32,5], index: 1, kind: input, shape index: {}]
  %s2 = inlined_call_operand.vmem [shape: f32[32,1], index: 2, kind: input, shape index: {}]
  %s3 = inlined_call_operand.vmem [shape: f32[32,32], index: 3, kind: input, shape index: {}]
  %s4 = inlined_call_operand.vmem [shape: f32[32,1], index: 4, kind: input, shape index: {}]
  %s5 = inlined_call_operand.vmem [shape: f32[24,32], index: 5, kind: input, shape index: {}]
  %s6 = inlined_call_operand.vmem [shape: f32[24,1], index: 6, kind: input, shape index: {}]
  %s7 = inlined_call_operand.hbm [shape: f32[24,128], index: 7, kind: output, shape index: {}]
  %s8 = sld [smem:[#allocation0]]
  $region38: #{tpu_custom_call.1} parent=0
    _
  %s10 = ssub.s32 1, %s8
  %s11 = scalar_select 0, %s10, %s8
  $region1: #{tpu_custom_call.1} parent=0
    #allocation2 [shape = 'u8[12288]{0}', space=vmem, size = 0x3000, scoped, tag = 'output window, operand 0, single buffered']
    #allocation3 [shape = 's32[1]{0}', space=sflag, size = 0x4, scoped, tag = 'scoped memory for tpu_custom_call.1']
    %12 = vsyncpa [#allocation3], 0
    // Predicated region
    $region2: #{tpu_custom_call.1} parent=1 // pred_check
      _
    $region3: #{tpu_custom_call.1} parent=1 // pred_check_branch
      %14 = sbr.rel (0) target = $region5
    $region4: #{tpu_custom_call.1} parent=1 // pred_region
      _
    $region5: #{tpu_custom_call.1} parent=1 // pred_fallthru
      _
    // Predicated region
    $region6: #{tpu_custom_call.1} parent=1 // pred_check
      _
    $region7: #{tpu_custom_call.1} parent=1 // pred_check_branch
      %16 = sbr.rel (0) target = $region9
    $region8: #{tpu_custom_call.1} parent=1 // pred_region
      _
    $region9: #{tpu_custom_call.1} parent=1 // pred_fallthru
      _
    // Predicated region
    $region10: #{tpu_custom_call.1} parent=1 // pred_check
      _
    $region11: #{tpu_custom_call.1} parent=1 // pred_check_branch
      %18 = sbr.rel (0) target = $region13
    $region12: #{tpu_custom_call.1} parent=1 // pred_region
      _
    $region13: #{tpu_custom_call.1} parent=1 // pred_fallthru
      _
    // Predicated region
    $region14: #{tpu_custom_call.1} parent=1 // pred_check
      _
    $region15: #{tpu_custom_call.1} parent=1 // pred_check_branch
      %20 = sbr.rel (0) target = $region17
    $region16: #{tpu_custom_call.1} parent=1 // pred_region
      _
    $region17: #{tpu_custom_call.1} parent=1 // pred_fallthru
      _
    // Predicated region
    $region18: #{tpu_custom_call.1} parent=1 // pred_check
      _
    $region19: #{tpu_custom_call.1} parent=1 // pred_check_branch
      %22 = sbr.rel (0) target = $region21
    $region20: #{tpu_custom_call.1} parent=1 // pred_region
      _
    $region21: #{tpu_custom_call.1} parent=1 // pred_fallthru
      _
    // Predicated region
    $region22: #{tpu_custom_call.1} parent=1 // pred_check
      _
    $region23: #{tpu_custom_call.1} parent=1 // pred_check_branch
      %24 = sbr.rel (0) target = $region25
    $region24: #{tpu_custom_call.1} parent=1 // pred_region
      _
    $region25: #{tpu_custom_call.1} parent=1 // pred_fallthru
      _
    // Predicated region
    $region26: #{tpu_custom_call.1} parent=1 // pred_check
      _
    $region27: #{tpu_custom_call.1} parent=1 // pred_check_branch
      %26 = sbr.rel (0) target = $region29
    $region28: #{tpu_custom_call.1} parent=1 // pred_region
      _
    $region29: #{tpu_custom_call.1} parent=1 // pred_fallthru
      _
    %v27 = vld [vmem:[%s0] sm:$0x1f]
    %v28 = vld [vmem:[%s1] sm:$0xff]
    %v29 = vld [vmem:[%s1 + $0x8] sm:$0xff]
    %v30 = vld [vmem:[%s1 + $0x10] sm:$0xff]
    %v31 = vld [vmem:[%s1 + $0x18] sm:$0xff]
    %v32 = vld [vmem:[%s2] sm:$0xff]
    %v33 = vld [vmem:[%s2 + $0x8] sm:$0xff]
    %v34 = vld [vmem:[%s2 + $0x10] sm:$0xff]
    %v35 = vld [vmem:[%s2 + $0x18] sm:$0xff]
    %37 = vset.pattern.permute.xlu0 0
    %38 = vperm.xlu0 %37, %v32
    %v39 = vpop.permute.xlu0 %38
    %42 = vset.pattern.permute.xlu0 0
    %43 = vperm.xlu0 %42, %v33
    %v44 = vpop.permute.xlu0 %43
    %47 = vset.pattern.permute.xlu0 0
    %48 = vperm.xlu0 %47, %v34
    %v49 = vpop.permute.xlu0 %48
    %52 = vset.pattern.permute.xlu0 0
    %53 = vperm.xlu0 %52, %v35
    %v54 = vpop.permute.xlu0 %53
    %vm56 = vcmask 39936
    %v58 = vsel %vm56, %v28, 0
    %v61 = vsel %vm56, %v29, 0
    %v64 = vsel %vm56, %v30, 0
    %v67 = vsel %vm56, %v31, 0
    %vm69 = vcmask 1044480
    %v71 = vsel %vm69, %v27, 0
    %73 = vmatpush.msra.mxu0 0.0
    %74 = vmatpush.msra.mxu0 0.0
    %75 = vmatpush.msra.mxu0 0.0
    %76 = vmatpush.msra.mxu0 0.0
    %77 = vmatpush.msra.mxu0 0.0
    %78 = vmatpush.msra.mxu0 0.0
    %79 = vmatpush.msra.mxu0 0.0
    %80 = vmatpush.msra.mxu0 0.0
    %81 = vmatpush.msra.mxu0 0.0
    %82 = vmatpush.msra.mxu0 0.0
    %83 = vmatpush.msra.mxu0 0.0
    %84 = vmatpush.msra.mxu0 0.0
    %85 = vmatpush.msra.mxu0 0.0
    %86 = vmatpush.msra.mxu0 0.0
    %87 = vmatpush.msra.mxu0 0.0
    %88 = vmatpush.msra.mxu0 %v71
    %89 = vmatmul.f32.gmra.mxu0 %v58
    %v90 = vpop.f32.mrf.mxu0
    %v91 = vadd.f32 %v39, %v90
    %92 = vmatmul.f32.gmra.mxu0 %v61
    %v93 = vpop.f32.mrf.mxu0
    %v94 = vadd.f32 %v44, %v93
    %95 = vmatmul.f32.gmra.mxu0 %v64
    %v96 = vpop.f32.mrf.mxu0
    %v97 = vadd.f32 %v49, %v96
    %98 = vmatmul.f32.gmra.mxu0 %v67
    %v99 = vpop.f32.mrf.mxu0
    %v100 = vadd.f32 %v54, %v99
    %101 = vdwg.mxu0
    %v102 = vmax.f32 %v91, 0.0
    %v103 = vmax.f32 %v94, 0.0
    %v104 = vmax.f32 %v97, 0.0
    %v105 = vmax.f32 %v100, 0.0
    %v106 = vld [vmem:[%s3] sm:$0xff]
    %v107 = vld [vmem:[%s3 + $0x8] sm:$0xff]
    %v108 = vld [vmem:[%s3 + $0x10] sm:$0xff]
    %v109 = vld [vmem:[%s3 + $0x18] sm:$0xff]
    %v110 = vld [vmem:[%s4] sm:$0xff]
    %v111 = vld [vmem:[%s4 + $0x8] sm:$0xff]
    %v112 = vld [vmem:[%s4 + $0x10] sm:$0xff]
    %v113 = vld [vmem:[%s4 + $0x18] sm:$0xff]
    %115 = vset.pattern.permute.xlu0 0
    %116 = vperm.xlu0 %115, %v110
    %v117 = vpop.permute.xlu0 %116
    %120 = vset.pattern.permute.xlu0 0
    %121 = vperm.xlu0 %120, %v111
    %v122 = vpop.permute.xlu0 %121
    %125 = vset.pattern.permute.xlu0 0
    %126 = vperm.xlu0 %125, %v112
    %v127 = vpop.permute.xlu0 %126
    %130 = vset.pattern.permute.xlu0 0
    %131 = vperm.xlu0 %130, %v113
    %v132 = vpop.permute.xlu0 %131
    %vm134 = vcmask 261120
    %v136 = vsel %vm134, %v106, 0
    %v139 = vsel %vm134, %v107, 0
    %v142 = vsel %vm134, %v108, 0
    %v145 = vsel %vm134, %v109, 0
    %147 = vmatpush.msra.mxu0 0.0
    %148 = vmatpush.msra.mxu0 0.0
    %149 = vmatpush.msra.mxu0 0.0
    %150 = vmatpush.msra.mxu0 0.0
    %151 = vmatpush.msra.mxu0 0.0
    %152 = vmatpush.msra.mxu0 0.0
    %153 = vmatpush.msra.mxu0 0.0
    %154 = vmatpush.msra.mxu0 0.0
    %155 = vmatpush.msra.mxu0 0.0
    %156 = vmatpush.msra.mxu0 0.0
    %157 = vmatpush.msra.mxu0 0.0
    %158 = vmatpush.msra.mxu0 0.0
    %159 = vmatpush.msra.mxu0 %v105
    %160 = vmatpush.msra.mxu0 %v104
    %161 = vmatpush.msra.mxu0 %v103
    %162 = vmatpush.msra.mxu0 %v102
    %163 = vmatmul.f32.gmra.mxu0 %v136
    %v164 = vpop.f32.mrf.mxu0
    %v165 = vadd.f32 %v117, %v164
    %166 = vmatmul.f32.gmra.mxu0 %v139
    %v167 = vpop.f32.mrf.mxu0
    %v168 = vadd.f32 %v122, %v167
    %169 = vmatmul.f32.gmra.mxu0 %v142
    %v170 = vpop.f32.mrf.mxu0
    %v171 = vadd.f32 %v127, %v170
    %172 = vmatmul.f32.gmra.mxu0 %v145
    %v173 = vpop.f32.mrf.mxu0
    %v174 = vadd.f32 %v132, %v173
    %175 = vdwg.mxu0
    %v176 = vmax.f32 %v165, 0.0
    %v177 = vmax.f32 %v168, 0.0
    %v178 = vmax.f32 %v171, 0.0
    %v179 = vmax.f32 %v174, 0.0
    %v180 = vld [vmem:[%s5] sm:$0xff]
    %v181 = vld [vmem:[%s5 + $0x8] sm:$0xff]
    %v182 = vld [vmem:[%s5 + $0x10] sm:$0xff]
    %v183 = vld [vmem:[%s6] sm:$0xff]
    %v184 = vld [vmem:[%s6 + $0x8] sm:$0xff]
    %v185 = vld [vmem:[%s6 + $0x10] sm:$0xff]
    %187 = vset.pattern.permute.xlu0 0
    %188 = vperm.xlu0 %187, %v183
    %v189 = vpop.permute.xlu0 %188
    %192 = vset.pattern.permute.xlu0 0
    %193 = vperm.xlu0 %192, %v184
    %v194 = vpop.permute.xlu0 %193
    %197 = vset.pattern.permute.xlu0 0
    %198 = vperm.xlu0 %197, %v185
    %v199 = vpop.permute.xlu0 %198
    %v202 = vsel %vm134, %v180, 0
    %v205 = vsel %vm134, %v181, 0
    %v208 = vsel %vm134, %v182, 0
    %210 = vmatpush.msra.mxu0 0.0
    %211 = vmatpush.msra.mxu0 0.0
    %212 = vmatpush.msra.mxu0 0.0
    %213 = vmatpush.msra.mxu0 0.0
    %214 = vmatpush.msra.mxu0 0.0
    %215 = vmatpush.msra.mxu0 0.0
    %216 = vmatpush.msra.mxu0 0.0
    %217 = vmatpush.msra.mxu0 0.0
    %218 = vmatpush.msra.mxu0 0.0
    %219 = vmatpush.msra.mxu0 0.0
    %220 = vmatpush.msra.mxu0 0.0
    %221 = vmatpush.msra.mxu0 0.0
    %222 = vmatpush.msra.mxu0 %v179
    %223 = vmatpush.msra.mxu0 %v178
    %224 = vmatpush.msra.mxu0 %v177
    %225 = vmatpush.msra.mxu0 %v176
    %226 = vmatmul.f32.gmra.mxu0 %v202
    %v227 = vpop.f32.mrf.mxu0
    %v228 = vadd.f32 %v189, %v227
    %229 = vmatmul.f32.gmra.mxu0 %v205
    %v230 = vpop.f32.mrf.mxu0
    %v231 = vadd.f32 %v194, %v230
    %232 = vmatmul.f32.gmra.mxu0 %v208
    %v233 = vpop.f32.mrf.mxu0
    %v234 = vadd.f32 %v199, %v233
    %235 = vdwg.mxu0
    %236 = vst [vmem:[#allocation2] sm:$0xff] %v228
    %237 = vst [vmem:[#allocation2 + $0x8] sm:$0xff] %v231
    %238 = vst [vmem:[#allocation2 + $0x10] sm:$0xff] %v234
    // Predicated region
    $region30: #{tpu_custom_call.1} parent=1 // pred_check
      _
    $region31: #{tpu_custom_call.1} parent=1 // pred_check_branch
      %240 = sbr.rel (0) target = $region33
    $region32: #{tpu_custom_call.1} parent=1 // pred_region
      %242 = vsyncadd [#allocation3], 0
      %s243 = sshll.u32 [#allocation2], 4
      %s244 = int_to_ptr.vmem [resolvable:$true] %s243
      %s245 = sshll.u32 %s7, 4
      %s246 = int_to_ptr.hbm [resolvable:$true] %s245
      %251 = dma.vmem_to_hbm [thread:$0]  %s244, 384, %s246, [#allocation3], 128, 128, 8
    $region33: #{tpu_custom_call.1} parent=1 // pred_fallthru
      _
    // Predicated region
    $region34: #{tpu_custom_call.1} parent=1 // pred_check
      _
    $region35: #{tpu_custom_call.1} parent=1 // pred_check_branch
      %253 = sbr.rel (0) target = $region37
    $region36: #{tpu_custom_call.1} parent=1 // pred_region
      %255 = dma.done [#allocation3], 384
    $region37: #{tpu_custom_call.1} parent=1 // pred_fallthru
      _
    %256 = vsyncpa [#allocation3], 1

</llo_original>
